<compile_context>
chip_gen: v7x
topology: tpu7x:2x2x1
jax: 0.10.0
libtpu: 0.0.40
codegen_flags: <defaults>
</compile_context>

<pallas_src>
import functools

import jax
import jax.numpy as jnp
from jax.experimental import pallas as pl
from jax.experimental.pallas import tpu as pltpu

_LANE = 128
_TILE_L_MAX = 1024                      # multiple of 128; sweep 512-2048 (v5e/v6e), ~1024 (v7x)
_VMEM_STEP_BUDGET = 24 * 1024 * 1024    # double-buffered per-step working-set target


def _conv_block(win_bf16, w_ref, b_ref, o_ref, k_taps, tile_l):
    """Shared body: conv taps (bf16 operands, f32 accumulation) + bias + ReLU.

    win_bf16: (C_in, >= tile_l + k_taps - 1) bf16 input window (a value, not a ref)
    w_ref:    (C_out, K*C_in) bf16  [folded-tap mode, small C_in]
              or (K, C_out, C_in) bf16 [per-tap mode]
    b_ref:    (C_out, 1) f32
    o_ref:    (C_out, tile_l) output block (time on lanes -> dense stores)
    """
    if len(w_ref.shape) == 2:
        # Folded taps: one MXU push with contraction dim K*C_in (better MXU
        # occupancy when C_in << 128/256).  RHS rows are stacked tap-major to
        # match the wrapper's (C_out, K*C_in) weight layout.
        rhs = jnp.concatenate(
            [win_bf16[:, k:k + tile_l] for k in range(k_taps)], axis=0)
        acc = jnp.dot(w_ref[...], rhs, preferred_element_type=jnp.float32)
    else:
        # Per-tap matmuls: contraction dim C_in per tap (fine once C_in >= 128).
        c_out = w_ref.shape[1]
        acc = jnp.zeros((c_out, tile_l), jnp.float32)
        for k in range(k_taps):                       # static unroll, K tiny
            acc = acc + jnp.dot(w_ref[k], win_bf16[:, k:k + tile_l],
                                preferred_element_type=jnp.float32)
    # Fused epilogue: bias + ReLU, single store.
    o_ref[...] = jnp.maximum(acc + b_ref[...], 0.0).astype(o_ref.dtype)


def _kernel_small(x_ref, w_ref, b_ref, o_ref, *, k_taps):
    # Single full-width time tile: the whole x block IS the conv window.
    tile_l = o_ref.shape[-1]
    _conv_block(x_ref[...].astype(jnp.bfloat16), w_ref, b_ref, o_ref, k_taps, tile_l)


def _kernel_tiled(x_main_ref, x_halo_ref, w_ref, b_ref, o_ref, *, k_taps):
    # Time tile + 128-column halo (first lanes of the next tile) -> conv window.
    tile_l = o_ref.shape[-1]
    win = jnp.concatenate(
        [x_main_ref[...].astype(jnp.bfloat16),
         x_halo_ref[...].astype(jnp.bfloat16)], axis=-1)
    _conv_block(win, w_ref, b_ref, o_ref, k_taps, tile_l)


def dxmml_forward(x, v, g, bias):
    """x: (B, C_in, L); v: (C_out, C_in, K); g, bias: (C_out,).

    Returns ReLU(weight_norm(Conv1d)(x)) in NCL layout: (B, C_out, L - K + 1), f32.
    """
    B, C_in, L = x.shape
    C_out, c_in_w, K = v.shape
    assert c_in_w == C_in
    L_out = L - K + 1
    assert L_out >= 1
    assert K - 1 <= _LANE, "halo block is sized for kernel_size <= 129"

    xb = jnp.dtype(x.dtype).itemsize

    # ---- weight_norm hoisted out of the per-grid-step path (one-time, tiny) ----
    v32 = v.astype(jnp.float32)
    inv_norm = jax.lax.rsqrt(jnp.sum(v32 * v32, axis=(1, 2), keepdims=True))
    w = (g.astype(jnp.float32)[:, None, None] * inv_norm) * v32   # (C_out, C_in, K)

    fold_taps = C_in < 128   # fold taps into one matmul only when contraction is tiny
    if fold_taps:
        # (C_out, K*C_in): columns tap-major then channel, matching the RHS stack.
        w_k = jnp.transpose(w, (0, 2, 1)).reshape(C_out, K * C_in).astype(jnp.bfloat16)
    else:
        w_k = jnp.transpose(w, (2, 0, 1)).astype(jnp.bfloat16)     # (K, C_out, C_in)
    w_shape = tuple(w_k.shape)
    w_zero = (0,) * len(w_shape)
    w_bytes = 2 * w_k.size
    b2 = bias.reshape(C_out, 1).astype(jnp.float32)

    cost = pl.CostEstimate(
        flops=2 * B * C_out * C_in * K * L_out,
        transcendentals=0,
        bytes_accessed=B * C_in * L * xb + w_bytes + B * C_out * L_out * 4)

    if L_out <= _TILE_L_MAX:
        # ---- small-sequence path: one full-width tile per batch element --------
        # (Sequence is bounded by _TILE_L_MAX + K - 1 here, so VMEM is bounded.)
        step_bytes = 2 * (C_in * L * xb + w_bytes + C_out * 4 + C_out * L_out * 4)
        return pl.pallas_call(
            functools.partial(_kernel_small, k_taps=K),
            out_shape=jax.ShapeDtypeStruct((B, C_out, L_out), jnp.float32),
            grid_spec=pl.GridSpec(
                grid=(B,),
                in_specs=[
                    pl.BlockSpec((None, C_in, L), lambda b: (b, 0, 0)),
                    pl.BlockSpec(w_shape, lambda b: w_zero),
                    pl.BlockSpec((C_out, 1), lambda b: (0, 0)),
                ],
                out_specs=pl.BlockSpec((None, C_out, L_out), lambda b: (b, 0, 0)),
            ),
            compiler_params=pltpu.CompilerParams(
                dimension_semantics=("parallel",),
                vmem_limit_bytes=max(32 * 1024 * 1024, step_bytes + (4 << 20))),
            cost_estimate=cost,
        )(x, w_k, b2)

    # ---- time-tiled path: main tile + 128-column halo block --------------------
    tile_l = _TILE_L_MAX

    def _step_bytes(t):   # double-buffered per-step working set
        return 2 * (C_in * t * xb + C_in * _LANE * xb + w_bytes
                    + C_out * 4 + C_out * t * 4)

    while tile_l > _LANE and _step_bytes(tile_l) > _VMEM_STEP_BUDGET:
        tile_l -= _LANE
    t_tiles = pl.cdiv(L_out, tile_l)
    blk_per_tile = tile_l // _LANE
    max_halo_blk = (L - 1) // _LANE    # last 128-block of x with >= 1 valid column

    def x_halo_map(b, t):
        # Halo = the 128 columns starting at (t+1)*tile_l.  Clamp so the block
        # never starts past the end of x; the clamp only triggers when every
        # output needing the halo is out of range (and masked on writeback).
        return (b, 0, jnp.minimum((t + 1) * blk_per_tile, max_halo_blk))

    return pl.pallas_call(
        functools.partial(_kernel_tiled, k_taps=K),
        out_shape=jax.ShapeDtypeStruct((B, C_out, L_out), jnp.float32),
        grid_spec=pl.GridSpec(
            grid=(B, t_tiles),
            in_specs=[
                pl.BlockSpec((None, C_in, tile_l), lambda b, t: (b, 0, t)),
                pl.BlockSpec((None, C_in, _LANE), x_halo_map),
                pl.BlockSpec(w_shape, lambda b, t: w_zero),
                pl.BlockSpec((C_out, 1), lambda b, t: (0, 0)),
            ],
            # Exact L_out out_shape: the ragged last time tile is a partial block
            # whose writeback Pallas masks (no wrapper pad / trailing slice).
            out_specs=pl.BlockSpec((None, C_out, tile_l), lambda b, t: (b, 0, t)),
        ),
        compiler_params=pltpu.CompilerParams(
            dimension_semantics=("parallel", "parallel"),
            vmem_limit_bytes=max(32 * 1024 * 1024, _step_bytes(tile_l) + (4 << 20))),
        cost_estimate=cost,
    )(x, x, w_k, b2)   # x passed twice: main tile view + halo view


# ------------------------------- validation ----------------------------------
def _reference(x, v, g, bias):
    v32 = v.astype(jnp.float32)
    norm = jnp.sqrt(jnp.sum(v32 * v32, axis=(1, 2), keepdims=True))
    w = (g.astype(jnp.float32)[:, None, None] / norm) * v32
    y = jax.lax.conv_general_dilated(
        x.astype(jnp.float32), w, window_strides=(1,), padding="VALID",
        dimension_numbers=("NCH", "OIH", "NCH"))
    y = y + bias.astype(jnp.float32)[None, :, None]
    return jnp.maximum(y, 0.0)


def _run_check(name, B, C_in, L, C_out, K, seed):
    key = jax.random.fold_in(jax.random.PRNGKey(0), seed)
    kx, kv, kg, kb = jax.random.split(key, 4)
    x = jax.random.normal(kx, (B, C_in, L), dtype=jnp.float32)
    v = jax.random.normal(kv, (C_out, C_in, K), jnp.float32) * 0.1
    g = jax.random.normal(kg, (C_out,), jnp.float32) * 0.1 + 1.0
    bias = jax.random.normal(kb, (C_out,), jnp.float32) * 0.01

    y = dxmml_forward(x, v, g, bias)
    jax.block_until_ready(y)
    assert y.shape == (B, C_out, L - K + 1), (name, y.shape)

    ref = _reference(x, v, g, bias)
    err = float(jnp.max(jnp.abs(y - ref)))
    # bf16 MXU operands (f32 accumulation) vs. a pure-f32 reference: typical max
    # abs error is ~1e-2 here (weight_norm keeps outputs O(1)); 5e-2 is the
    # standard bf16-vs-f32 tolerance.
    assert jnp.allclose(y, ref, atol=5e-2, rtol=5e-2), f"{name}: max abs err {err}"


if __name__ == "__main__":
    # Module-consistent small shapes: input_size=4, hidden_size=32, kernel_size=3.
    _run_check("small_folded", B=2, C_in=4, L=16, C_out=32, K=3, seed=0)
    # Per-tap branch (C_in >= 128), still the single-tile path.
    _run_check("small_per_tap", B=2, C_in=128, L=16, C_out=32, K=3, seed=1)
    # Time-tiled path: multiple tiles, ragged last tile, clamped halo block.
    _run_check("tiled_halo", B=2, C_in=8, L=2502, C_out=32, K=3, seed=2)
    print("KERNEL_OK")
</pallas_src>

<mosaic_0001>
module attributes {stable_mosaic.version = 11 : i64} {
  func.func @_kernel_small(%arg0: i32, %arg1: memref<1x4x16xf32, #tpu.memory_space<vmem>>, %arg2: memref<32x12xbf16, #tpu.memory_space<vmem>>, %arg3: memref<32x1xf32, #tpu.memory_space<vmem>>, %arg4: memref<1x32x14xf32, #tpu.memory_space<vmem>>) attributes {dimension_semantics = [#tpu.dimension_semantics<parallel>], iteration_bounds = array<i64: 2>, scalar_prefetch = 0 : i64, scratch_operands = 0 : i64, tpu.core_type = #tpu.core_type<tc>, window_params = [{transform_indices = @transform_0, window_bounds = array<i64: 1, 4, 16>}, {pipeline_mode = #tpu.pipeline_mode<synchronous>, transform_indices = @transform_1, window_bounds = array<i64: 32, 12>}, {pipeline_mode = #tpu.pipeline_mode<synchronous>, transform_indices = @transform_2, window_bounds = array<i64: 32, 1>}, {transform_indices = @transform_3, window_bounds = array<i64: 1, 32, 14>}]} {
    %c0 = arith.constant 0 : index
    %c0_0 = arith.constant 0 : index
    %c0_1 = arith.constant 0 : index
    %0 = vector.load %arg1[%c0, %c0_0, %c0_1] : memref<1x4x16xf32, #tpu.memory_space<vmem>>, vector<1x4x16xf32>
    %1 = vector.shape_cast %0 : vector<1x4x16xf32> to vector<4x16xf32>
    %2 = arith.truncf %1 : vector<4x16xf32> to vector<4x16xbf16>
    %3 = vector.extract_strided_slice %2 {offsets = [0, 0], sizes = [4, 14], strides = [1, 1]} : vector<4x16xbf16> to vector<4x14xbf16>
    %4 = vector.extract_strided_slice %2 {offsets = [0, 1], sizes = [4, 14], strides = [1, 1]} : vector<4x16xbf16> to vector<4x14xbf16>
    %5 = vector.extract_strided_slice %2 {offsets = [0, 2], sizes = [4, 14], strides = [1, 1]} : vector<4x16xbf16> to vector<4x14xbf16>
    %6 = tpu.concatenate %3, %4, %5 in 0 : vector<4x14xbf16>, vector<4x14xbf16>, vector<4x14xbf16> -> vector<12x14xbf16>
    %c0_2 = arith.constant 0 : index
    %c0_3 = arith.constant 0 : index
    %7 = vector.load %arg2[%c0_2, %c0_3] : memref<32x12xbf16, #tpu.memory_space<vmem>>, vector<32x12xbf16>
    %cst = arith.constant dense<0.000000e+00> : vector<32x14xf32>
    %8 = tpu.matmul %7, %6, %cst {dimension_numbers = #tpu.dot_dimension_numbers<[1], [0], [0], [1], [0, 0, 1, 1], [], []>} : vector<32x12xbf16>, vector<12x14xbf16>, vector<32x14xf32> -> vector<32x14xf32>
    %c0_4 = arith.constant 0 : index
    %c0_5 = arith.constant 0 : index
    %9 = vector.load %arg3[%c0_4, %c0_5] : memref<32x1xf32, #tpu.memory_space<vmem>>, vector<32x1xf32>
    %10 = vector.broadcast %9 : vector<32x1xf32> to vector<32x14xf32>
    %11 = arith.addf %8, %10 : vector<32x14xf32>
    %cst_6 = arith.constant 0.000000e+00 : f32
    %12 = vector.broadcast %cst_6 : f32 to vector<32x14xf32>
    %13 = arith.maximumf %11, %12 : vector<32x14xf32>
    %c0_7 = arith.constant 0 : index
    %c0_8 = arith.constant 0 : index
    %c0_9 = arith.constant 0 : index
    %14 = vector.load %arg4[%c0_7, %c0_8, %c0_9] : memref<1x32x14xf32, #tpu.memory_space<vmem>>, vector<1x32x14xf32>
    %15 = vector.shape_cast %14 : vector<1x32x14xf32> to vector<32x14xf32>
    %16 = vector.shape_cast %13 : vector<32x14xf32> to vector<1x32x14xf32>
    tpu.vector_store %arg4[%c0_7, %c0_8, %c0_9], %16 {strides = array<i32>} : memref<1x32x14xf32, #tpu.memory_space<vmem>>, vector<1x32x14xf32>,
    return
  }
  func.func @transform_0(%arg0: i32) -> (i32, i32, i32) {
    %c0_i32 = arith.constant 0 : i32
    %c0_i32_0 = arith.constant 0 : i32
    %c0_i32_1 = arith.constant 0 : i32
    return %arg0, %c0_i32, %c0_i32_0 : i32, i32, i32
  }
  func.func @transform_1(%arg0: i32) -> (i32, i32) {
    %c0_i32 = arith.constant 0 : i32
    %c0_i32_0 = arith.constant 0 : i32
    %c0_i32_1 = arith.constant 0 : i32
    return %c0_i32, %c0_i32_0 : i32, i32
  }
  func.func @transform_2(%arg0: i32) -> (i32, i32) {
    %c0_i32 = arith.constant 0 : i32
    %c0_i32_0 = arith.constant 0 : i32
    %c0_i32_1 = arith.constant 0 : i32
    return %c0_i32, %c0_i32_0 : i32, i32
  }
  func.func @transform_3(%arg0: i32) -> (i32, i32, i32) {
    %c0_i32 = arith.constant 0 : i32
    %c0_i32_0 = arith.constant 0 : i32
    %c0_i32_1 = arith.constant 0 : i32
    return %arg0, %c0_i32, %c0_i32_0 : i32, i32, i32
  }
}

</mosaic_0001>

<llo_original>
// kernel: tpu_custom_call.1
$region0: #{tpu_custom_call.1}
  #allocation0 [shape = 'u32[]', space=smem, size = 0x4, offset = 0x4, fixed_abs, tag = 'smem constant byte address 0x4 - core index']
  #allocation1 [shape = 'u32[144,128]{1,0:T(1,128)}', space=vmem, size = 0x12000, scoped, tag = 'internal scratch']
  %s0 = inlined_call_operand.vmem [shape: f32[2,4,16], index: 0, kind: input, shape index: {}]
  %s1 = inlined_call_operand.vmem [shape: bf16[32,12], index: 1, kind: input, shape index: {}]
  %s2 = inlined_call_operand.vmem [shape: f32[32,1], index: 2, kind: input, shape index: {}]
  %s3 = inlined_call_operand.vmem [shape: f32[2,32,14], index: 3, kind: output, shape index: {}]
  %s4 = sld [smem:[#allocation0]]
  $region45: #{tpu_custom_call.1} parent=0
    _
  %s6 = ssub.s32 1, %s4
  %s7 = scalar_select 0, %s6, %s4
  loop: start=0, step=1, limit=4
  $region2: #{tpu_custom_call.1} parent=0 // loop_pre_header
    _
  $region3: #{tpu_custom_call.1} parent=0 // loop_header
    %s9 = sphi 0, %s13
    %p10 = scmp.ge.s32.totalorder %s9, 4
    %s19 = sphi 0, %s21
    %s22 = sphi 0, %s19
    %s23 = sphi 0, %s22
    %s39 = sphi 0, %s23
    %s43 = sphi 0, %s43
    %s45 = sphi 0, %s43
    %s46 = sphi 0, %s45
    %s60 = sphi 0, %s46
    %s64 = sphi 0, %s64
    %s66 = sphi 0, %s64
    %s67 = sphi 0, %s66
    %s81 = sphi 0, %s67
    %s87 = sphi 0, %s89
    %s90 = sphi 0, %s87
    %s91 = sphi 0, %s90
    %s107 = sphi 0, %s91
  $region4: #{tpu_custom_call.1} parent=0 // loop_header_branch
    %12 = sbr.rel (%p10) target = $region8
  $region5: #{tpu_custom_call.1} parent=0 // loop_body
    %s14 = ssub.s32 %s9, 1
    %s15 = ssub.s32 %s9, 2
    %s16 = sadd.s32 %s9, 1
    %s17 = ssub.s32 %s9, %s16
    %p18 = scmp.eq.s32.totalorder %s17, 0
    %s20 = sadd.s32 %s19, 1
    %s21 = scalar_select %p18, %s19, %s20
    %p24 = pneg %p18
    %p25 = scmp.eq.s32.totalorder %s9, 1
    %p26 = por %p24, %p25
    %p27 = scmp.ne.s32.totalorder %s19, %s22
    %p28 = scmp.eq.s32.totalorder %s9, 0
    %p29 = por %p27, %p28
    %p30 = scmp.ne.s32.totalorder %s19, %s22
    %p31 = scmp.eq.s32.totalorder %s14, 1
    %p32 = por %p30, %p31
    %p33 = scmp.ne.s32.totalorder %s22, %s23
    %p34 = scmp.eq.s32.totalorder %s14, 0
    %p35 = por %p33, %p34
    %p36 = scmp.ne.s32.totalorder %s22, %s23
    %p37 = scmp.eq.s32.totalorder %s15, 1
    %p38 = por %p36, %p37
    %p40 = scmp.ne.s32.totalorder %s23, %s39
    %p41 = scmp.eq.s32.totalorder %s15, 0
    %p42 = por %p40, %p41
    %s44 = sadd.s32 %s43, 1
    %p47 = scmp.eq.s32.totalorder %s9, 1
    %p48 = scmp.ne.s32.totalorder %s43, %s45
    %p49 = scmp.eq.s32.totalorder %s9, 0
    %p50 = por %p48, %p49
    %p51 = scmp.ne.s32.totalorder %s43, %s45
    %p52 = scmp.eq.s32.totalorder %s14, 1
    %p53 = por %p51, %p52
    %p54 = scmp.ne.s32.totalorder %s45, %s46
    %p55 = scmp.eq.s32.totalorder %s14, 0
    %p56 = por %p54, %p55
    %p57 = scmp.ne.s32.totalorder %s45, %s46
    %p58 = scmp.eq.s32.totalorder %s15, 1
    %p59 = por %p57, %p58
    %p61 = scmp.ne.s32.totalorder %s46, %s60
    %p62 = scmp.eq.s32.totalorder %s15, 0
    %p63 = por %p61, %p62
    %s65 = sadd.s32 %s64, 1
    %p68 = scmp.eq.s32.totalorder %s9, 1
    %p69 = scmp.ne.s32.totalorder %s64, %s66
    %p70 = scmp.eq.s32.totalorder %s9, 0
    %p71 = por %p69, %p70
    %p72 = scmp.ne.s32.totalorder %s64, %s66
    %p73 = scmp.eq.s32.totalorder %s14, 1
    %p74 = por %p72, %p73
    %p75 = scmp.ne.s32.totalorder %s66, %s67
    %p76 = scmp.eq.s32.totalorder %s14, 0
    %p77 = por %p75, %p76
    %p78 = scmp.ne.s32.totalorder %s66, %s67
    %p79 = scmp.eq.s32.totalorder %s15, 1
    %p80 = por %p78, %p79
    %p82 = scmp.ne.s32.totalorder %s67, %s81
    %p83 = scmp.eq.s32.totalorder %s15, 0
    %p84 = por %p82, %p83
    %s85 = ssub.s32 %s9, %s16
    %p86 = scmp.eq.s32.totalorder %s85, 0
    %s88 = sadd.s32 %s87, 1
    %s89 = scalar_select %p86, %s87, %s88
    %p92 = pneg %p86
    %p93 = scmp.eq.s32.totalorder %s9, 1
    %p94 = por %p92, %p93
    %p95 = scmp.ne.s32.totalorder %s87, %s90
    %p96 = scmp.eq.s32.totalorder %s9, 0
    %p97 = por %p95, %p96
    %p98 = scmp.ne.s32.totalorder %s87, %s90
    %p99 = scmp.eq.s32.totalorder %s14, 1
    %p100 = por %p98, %p99
    %p101 = scmp.ne.s32.totalorder %s90, %s91
    %p102 = scmp.eq.s32.totalorder %s14, 0
    %p103 = por %p101, %p102
    %p104 = scmp.ne.s32.totalorder %s90, %s91
    %p105 = scmp.eq.s32.totalorder %s15, 1
    %p106 = por %p104, %p105
    %p108 = scmp.ne.s32.totalorder %s91, %s107
    %p109 = scmp.eq.s32.totalorder %s15, 0
    %p110 = por %p108, %p109
    %p111 = scmp.le.s32.totalorder 1, %s9
    %p112 = scmp.lt.s32.totalorder %s9, 3
    %p113 = pnand %p111, %p112
    %p114 = pneg %p113
    // Predicated region
    $region9: #{tpu_custom_call.1} parent=5 // pred_check
      _
    $region10: #{tpu_custom_call.1} parent=5 // pred_check_branch
      %116 = sbr.rel (%p113) target = $region12
    $region11: #{tpu_custom_call.1} parent=5 // pred_region
      %s117 = ssub.s32 %s9, 1
      // Predicated region
      $region13: #{tpu_custom_call.1} parent=11 // pred_check
        %p118 = pneg %p56
      $region14: #{tpu_custom_call.1} parent=11 // pred_check_branch
        %120 = sbr.rel (%p118) target = $region16
      $region15: #{tpu_custom_call.1} parent=11 // pred_region
        _
      $region16: #{tpu_custom_call.1} parent=11 // pred_fallthru
        _
      // Predicated region
      $region17: #{tpu_custom_call.1} parent=11 // pred_check
        %p121 = pneg %p77
      $region18: #{tpu_custom_call.1} parent=11 // pred_check_branch
        %123 = sbr.rel (%p121) target = $region20
      $region19: #{tpu_custom_call.1} parent=11 // pred_region
        _
      $region20: #{tpu_custom_call.1} parent=11 // pred_fallthru
        _
    $region12: #{tpu_custom_call.1} parent=5 // pred_fallthru
      _
    %p124 = scmp.lt.s32.totalorder %s9, 2
    // Predicated region
    $region21: #{tpu_custom_call.1} parent=5 // pred_check
      %p125 = pneg %p124
    $region22: #{tpu_custom_call.1} parent=5 // pred_check_branch
      %127 = sbr.rel (%p125) target = $region24
    $region23: #{tpu_custom_call.1} parent=5 // pred_region
      // Predicated region
      $region25: #{tpu_custom_call.1} parent=23 // pred_check
        %p128 = pneg %p29
      $region26: #{tpu_custom_call.1} parent=23 // pred_check_branch
        %130 = sbr.rel (%p128) target = $region28
      $region27: #{tpu_custom_call.1} parent=23 // pred_region
        %p131 = scmp.lt.s32.totalorder %s9, 1
        %s132 = scalar_select %p131, %s9, 1
        %s133 = smul.addr %s132, 4
        %s134 = scalar_lea.vmem %s0, %s133
      $region28: #{tpu_custom_call.1} parent=23 // pred_fallthru
        _
    $region24: #{tpu_custom_call.1} parent=5 // pred_fallthru
      _
    %p135 = scmp.le.s32.totalorder 1, %s9
    %p136 = scmp.lt.s32.totalorder %s9, 3
    %p137 = pnand %p135, %p136
    %p138 = pneg %p137
    // Predicated region
    $region29: #{tpu_custom_call.1} parent=5 // pred_check
      _
    $region30: #{tpu_custom_call.1} parent=5 // pred_check_branch
      %140 = sbr.rel (%p137) target = $region32
    $region31: #{tpu_custom_call.1} parent=5 // pred_region
      %s141 = ssub.s32 %s9, 1
      %p142 = scmp.lt.s32.totalorder %s14, 1
      %s143 = scalar_select %p142, %s14, 1
      %s144 = smul.addr %s143, 4
      %s145 = scalar_lea.vmem %s0, %s144
      %p146 = pneg %p35
      %p147 = pneg %p32
      %p148 = pneg %p56
      %p149 = pneg %p53
      %p150 = pneg %p77
      %p151 = pneg %p74
      %p152 = pneg %p103
      %p153 = pneg %p100
      %p154 = scmp.lt.s32.totalorder %s14, 1
      %s155 = scalar_select %p154, %s14, 1
      %s156 = smul.addr %s155, 4
      %s157 = smul.addr %s156, 8
      %s158 = scalar_lea.vmem %s3, %s157
      %p159 = scmp.lt.s32.totalorder %s14, 1
      %s160 = scalar_select %p159, %s14, 1
      %s161 = smul.addr %s160, 4
      %s162 = scalar_lea.vmem %s0, %s161
      %p163 = scmp.lt.s32.totalorder %s14, 1
      %s164 = scalar_select %p163, %s14, 1
      %s165 = smul.addr %s164, 4
      %s166 = smul.addr %s165, 8
      %s167 = scalar_lea.vmem %s3, %s166
      %v169 = vld [vmem:[%s162] sm:$0xf]
      %v170 = vpack.c.bf16 %v169, %v169
      %v172 = vrot.slane %v170, 6
      %173 = vrot.lane.b32.xlu0 %v172, 127
      %v174 = vpop.permute.xlu0 %173
      %v175 = vrot.slane %v170, 4
      %176 = vrot.lane.b32.xlu0 %v175, 126
      %v177 = vpop.permute.xlu0 %176
      %vm178 = vcmask 1041408
      %v181 = vsel %vm178, %v170, %v174
      %vm182 = vcmask 1043456
      %v184 = vsel %vm182, %v181, %v177
      %v185 = vld [vmem:[%s1] sm:$0xf]
      %v186 = vld [vmem:[%s1 + $0x4] sm:$0xf]
      %v187 = vld [vmem:[%s1 + $0x8] sm:$0xf]
      %v188 = vld [vmem:[%s1 + $0xc] sm:$0xf]
      %v189 = vld [vmem:[%s2] sm:$0xff]
      %v190 = vld [vmem:[%s2 + $0x8] sm:$0xff]
      %v191 = vld [vmem:[%s2 + $0x10] sm:$0xff]
      %v192 = vld [vmem:[%s2 + $0x18] sm:$0xff]
      %194 = vset.pattern.permute.xlu0 0
      %195 = vperm.xlu0 %194, %v189
      %v196 = vpop.permute.xlu0 %195
      %199 = vset.pattern.permute.xlu0 0
      %200 = vperm.xlu0 %199, %v190
      %v201 = vpop.permute.xlu0 %200
      %204 = vset.pattern.permute.xlu0 0
      %205 = vperm.xlu0 %204, %v191
      %v206 = vpop.permute.xlu0 %205
      %209 = vset.pattern.permute.xlu0 0
      %210 = vperm.xlu0 %209, %v192
      %v211 = vpop.permute.xlu0 %210
      %v217 = vunpack.c.l.b16 %v185
      %v218 = vunpack.c.l.b16 %v186
      %v219 = vunpack.c.l.b16 %v187
      %v220 = vunpack.c.l.b16 %v188
      %v221 = vpack.c.b16 %v218, %v217
      %v222 = vpack.c.b16 %v220, %v219
      %vm223 = vcmask 97280
      %v225 = vsel %vm223, %v221, 0
      %v228 = vsel %vm223, %v222, 0
      %vm230 = vcmask 1045504
      %v231 = vsel %vm230, %v184, 0
      %233 = vmatprep.subr.bf16.mxu0 0
      %234 = vmatpush1.bf16.msra.mxu0 %v231
      %235 = vmatprep.subr.bf16.mxu0 0
      %236 = vmatpush1.bf16.msra.mxu0 0
      %237 = vmatprep.subr.bf16.mxu0 0
      %238 = vmatpush1.bf16.msra.mxu0 0
      %239 = vmatprep.subr.bf16.mxu0 0
      %240 = vmatpush1.bf16.msra.mxu0 0
      %241 = vmatprep.subr.bf16.mxu0 0
      %242 = vmatpush1.bf16.msra.mxu0 0
      %243 = vmatprep.subr.bf16.mxu0 0
      %244 = vmatpush1.bf16.msra.mxu0 0
      %245 = vmatprep.subr.bf16.mxu0 0
      %246 = vmatpush1.bf16.msra.mxu0 0
      %247 = vmatprep.subr.bf16.mxu0 0
      %248 = vmatpush1.bf16.msra.mxu0 0
      %249 = vmatprep.subr.bf16.mxu0 0
      %250 = vmatpush1.bf16.msra.mxu0 0
      %251 = vmatprep.subr.bf16.mxu0 0
      %252 = vmatpush1.bf16.msra.mxu0 0
      %253 = vmatprep.subr.bf16.mxu0 0
      %254 = vmatpush1.bf16.msra.mxu0 0
      %255 = vmatprep.subr.bf16.mxu0 0
      %256 = vmatpush1.bf16.msra.mxu0 0
      %257 = vmatprep.subr.bf16.mxu0 0
      %258 = vmatpush1.bf16.msra.mxu0 0
      %259 = vmatprep.subr.bf16.mxu0 0
      %260 = vmatpush1.bf16.msra.mxu0 0
      %261 = vmatprep.subr.bf16.mxu0 0
      %262 = vmatpush1.bf16.msra.mxu0 0
      %263 = vmatprep.subr.bf16.mxu0 0
      %264 = vmatpush1.bf16.msra.mxu0 0
      %265 = vmatprep.mubr.bf16.mxu0 0
      %266 = vmatmul.mubr.bf16.gmra.mrb[0].mxu0 %v225
      %v267 = vpop.f32.mrb[0].mxu0
      %v268 = vadd.f32 %v196, %v267
      %v269 = vpop.f32.mrb[0].mxu0
      %v270 = vpop.f32.mrb[0].mxu0
      %v271 = vadd.f32 %v201, %v270
      %v272 = vpop.f32.mrb[0].mxu0
      %273 = vmatprep.mubr.bf16.mxu0 0
      %274 = vmatmul.mubr.bf16.gmra.mrb[0].mxu0 %v228
      %v275 = vpop.f32.mrb[0].mxu0
      %v276 = vadd.f32 %v206, %v275
      %v277 = vpop.f32.mrb[0].mxu0
      %v278 = vpop.f32.mrb[0].mxu0
      %v279 = vadd.f32 %v211, %v278
      %v280 = vpop.f32.mrb[0].mxu0
      %281 = vdwg.mxu0
      %v282 = vmax.f32 %v268, 0.0
      %v283 = vmax.f32 %v271, 0.0
      %v284 = vmax.f32 %v276, 0.0
      %v285 = vmax.f32 %v279, 0.0
      %vm286 = vcmask 113664
      %287 = vst.msk [vmem:[%s167] sm:$0xff] %vm286, %v282
      %288 = vst.msk [vmem:[%s167 + $0x8] sm:$0xff] %vm286, %v283
      %289 = vst.msk [vmem:[%s167 + $0x10] sm:$0xff] %vm286, %v284
      %290 = vst.msk [vmem:[%s167 + $0x18] sm:$0xff] %vm286, %v285
      %p291 = scmp.lt.s32.totalorder %s14, 1
      %s292 = scalar_select %p291, %s14, 1
      %s293 = smul.addr %s292, 4
      %s294 = smul.addr %s293, 8
      %s295 = scalar_lea.vmem %s3, %s294
      // Predicated region
      $region33: #{tpu_custom_call.1} parent=31 // pred_check
        %p296 = pneg %p100
      $region34: #{tpu_custom_call.1} parent=31 // pred_check_branch
        %298 = sbr.rel (%p296) target = $region36
      $region35: #{tpu_custom_call.1} parent=31 // pred_region
        _
      $region36: #{tpu_custom_call.1} parent=31 // pred_fallthru
        _
    $region32: #{tpu_custom_call.1} parent=5 // pred_fallthru
      _
    %p299 = scmp.le.s32.totalorder 2, %s9
    // Predicated region
    $region37: #{tpu_custom_call.1} parent=5 // pred_check
      %p300 = pneg %p299
    $region38: #{tpu_custom_call.1} parent=5 // pred_check_branch
      %302 = sbr.rel (%p300) target = $region40
    $region39: #{tpu_custom_call.1} parent=5 // pred_region
      %s303 = ssub.s32 %s9, 2
      // Predicated region
      $region41: #{tpu_custom_call.1} parent=39 // pred_check
        %p304 = pneg %p106
      $region42: #{tpu_custom_call.1} parent=39 // pred_check_branch
        %306 = sbr.rel (%p304) target = $region44
      $region43: #{tpu_custom_call.1} parent=39 // pred_region
        %p307 = scmp.lt.s32.totalorder %s15, 1
        %s308 = scalar_select %p307, %s15, 1
        %s309 = smul.addr %s308, 4
        %s310 = smul.addr %s309, 8
        %s311 = scalar_lea.vmem %s3, %s310
      $region44: #{tpu_custom_call.1} parent=39 // pred_fallthru
        _
    $region40: #{tpu_custom_call.1} parent=5 // pred_fallthru
      _
  $region6: #{tpu_custom_call.1} parent=0 // loop_footer
    %s13 = sadd.s32 1, %s9
  $region7: #{tpu_custom_call.1} parent=0 // loop_footer_branch
    %8 = sbr.rel target = $region3
  $region8: #{tpu_custom_call.1} parent=0 // loop_exit
    _

</llo_original>
